<compile_context>
chip_gen: v7x
topology: tpu7x:2x2x1
jax: 0.10.0
libtpu: 0.0.40
codegen_flags: <defaults>
</compile_context>

<pallas_src>
import jax
import jax.numpy as jnp
from jax.experimental import pallas as pl
from jax.experimental.pallas import tpu as pltpu


def _round_up(x, m):
    return (x + m - 1) // m * m


# -------------------------------------------------------------------------------------------------
# Kernel: one MXU matmul per batch tile (both grouped 1x1 convs are fused into W_fused host-side).
# -------------------------------------------------------------------------------------------------
def _capsule_fused_kernel(x_ref, w_ref, b_ref, out_ref):
    # x tile : (tb, ch_in*n_in)     full-width contiguous HBM DMA
    # w      : (ch_in*n_in, N_pad)  resident (constant index map), bf16 or f32
    # b      : (1, N_pad)           f32, added post-accumulation
    # out    : (tb, N_pad)          lane-dense store (N_pad % 128 == 0)
    x = x_ref[...].astype(w_ref.dtype)
    acc = jnp.dot(x, w_ref[...], preferred_element_type=jnp.float32)
    out_ref[...] = (acc + b_ref[...]).astype(out_ref.dtype)


# -------------------------------------------------------------------------------------------------
# One-time parameter preparation (hoist out of the per-forward path).
# -------------------------------------------------------------------------------------------------
def make_capsule_fused_params(w1, b1, w2, b2, *, ch_in, n_in, ch_out, n_out,
                              weight_dtype=jnp.bfloat16):
    """Fold conv_vector and conv_channel (both 1x1, grouped) into a single affine map.

    Exact (no nonlinearity between the two convs). Returns (w_fused, b_fused) with the output
    columns zero-padded so w_fused.shape[1] is a multiple of 128 (lane-dense store path).
    Output flat column layout is c-major / j-minor so reshape(B, ch_out, n_out) is a pure view.
    Build this ONCE next to the parameters, not per forward.
    """
    f32 = jnp.float32
    w1r = jnp.asarray(w1, f32).reshape(ch_in, n_out, n_in)     # [g, j, i]
    b1r = jnp.asarray(b1, f32).reshape(ch_in, n_out)           # [g, j]
    w2r = jnp.asarray(w2, f32).reshape(n_out, ch_out, ch_in)   # [j, c, g]
    b2r = jnp.asarray(b2, f32).reshape(n_out, ch_out)          # [j, c]

    K = ch_in * n_in
    N = ch_out * n_out
    w_fused = jnp.einsum("gji,jcg->gicj", w1r, w2r).reshape(K, N)
    b_fused = (jnp.einsum("gj,jcg->cj", b1r, w2r) + b2r.T).reshape(1, N)

    N_pad = _round_up(N, 128)
    if N_pad != N:
        w_fused = jnp.pad(w_fused, ((0, 0), (0, N_pad - N)))
        b_fused = jnp.pad(b_fused, ((0, 0), (0, N_pad - N)))
    return w_fused.astype(weight_dtype), b_fused.astype(jnp.float32)


def _choose_batch_tile(B, K, N_pad, x_itemsize, out_itemsize,
                       tile_vmem_budget=16 << 20, tb_cap=1024):
    """Pick the batch tile: VMEM-budgeted, equal-ish tiles, >=2 grid steps when batch permits."""
    per_row = 2 * (K * x_itemsize + N_pad * out_itemsize)          # double-buffered x + out tiles
    tb_max = max(8, min(tb_cap, (tile_vmem_budget // max(per_row, 1)) // 8 * 8))
    # >=2 steps so the "parallel" axis shards across v7x's two TensorCores; equal-ish tiles keep
    # padded (wasted) HBM write traffic small for awkward B.
    min_tiles = 2 if B >= 16 else 1
    num_tiles = max(min_tiles, pl.cdiv(B, tb_max))
    tb = min(tb_max, _round_up(pl.cdiv(B, num_tiles), 8))
    grid_n = pl.cdiv(B, tb)
    return tb, grid_n


def capsules_linear_forward(x, w_fused, b_fused, *, ch_in, n_in, ch_out, n_out, tb_cap=1024):
    """x: any shape reshapeable to (-1, ch_in*n_in). w_fused/b_fused from make_capsule_fused_params."""
    K = ch_in * n_in
    N = ch_out * n_out
    N_pad = w_fused.shape[1]
    out_dtype = x.dtype

    x2 = x.reshape(-1, K)
    B = x2.shape[0]

    tb, grid_n = _choose_batch_tile(B, K, N_pad, x2.dtype.itemsize,
                                    jnp.dtype(out_dtype).itemsize, tb_cap=tb_cap)
    B_pad = grid_n * tb
    if B_pad != B:
        x2 = jnp.pad(x2, ((0, B_pad - B), (0, 0)))

    cost = pl.CostEstimate(
        flops=2 * B_pad * K * N_pad,
        transcendentals=0,
        bytes_accessed=(B_pad * K * x2.dtype.itemsize
                        + K * N_pad * jnp.dtype(w_fused.dtype).itemsize
                        + N_pad * 4
                        + B_pad * N_pad * jnp.dtype(out_dtype).itemsize),
    )

    out_flat = pl.pallas_call(
        _capsule_fused_kernel,
        out_shape=jax.ShapeDtypeStruct((B_pad, N_pad), out_dtype),
        grid=(grid_n,),
        in_specs=[
            pl.BlockSpec((tb, K), lambda b: (b, 0)),
            pl.BlockSpec((K, N_pad), lambda b: (0, 0)),
            pl.BlockSpec((1, N_pad), lambda b: (0, 0)),
        ],
        out_specs=pl.BlockSpec((tb, N_pad), lambda b: (b, 0)),
        compiler_params=pltpu.CompilerParams(
            dimension_semantics=("parallel",),
            vmem_limit_bytes=48 * 1024 * 1024,
        ),
        cost_estimate=cost,
    )(x2, w_fused, b_fused)

    # lane-dense flat output -> (B, ch_out, n_out); drop batch/column padding
    return out_flat[:B, :N].reshape(B, ch_out, n_out)


def _reference(x, w1, b1, w2, b2, *, ch_in, n_in, ch_out, n_out):
    """Pure-JAX replica of the PyTorch forward (unfused) for verification."""
    x2 = x.reshape(-1, ch_in * n_in)
    B = x2.shape[0]
    xf = x2.reshape(B, ch_in, n_in)
    w1r = w1.reshape(ch_in, n_out, n_in)
    b1r = b1.reshape(ch_in, n_out)
    vote = jnp.einsum("bgi,gji->bgj", xf, w1r) + b1r[None]          # (B, ch_in, n_out)
    w2r = w2.reshape(n_out, ch_out, ch_in)
    b2r = b2.reshape(n_out, ch_out)
    out = jnp.einsum("bgj,jcg->bcj", vote, w2r) + b2r.T[None]       # (B, ch_out, n_out)
    return out


if __name__ == "__main__":
    # small shapes consistent with the module
    ch_in, n_in, ch_out, n_out = 4, 8, 8, 16

    key = jax.random.PRNGKey(0)
    kx, kw1, kb1, kw2, kb2 = jax.random.split(key, 5)

    # deterministic synthetic parameters in PyTorch Conv2d weight layouts (squeezed 1x1 kernels)
    w1 = jax.random.normal(kw1, (ch_in * n_out, n_in), dtype=jnp.float32) * 0.1
    b1 = jax.random.normal(kb1, (ch_in * n_out,), dtype=jnp.float32) * 0.1
    w2 = jax.random.normal(kw2, (n_out * ch_out, ch_in), dtype=jnp.float32) * 0.1
    b2 = jax.random.normal(kb2, (n_out * ch_out,), dtype=jnp.float32) * 0.1

    # Fused params built ONCE (hoisted out of the forward path).
    variants = [
        # (weight dtype for the MXU, tolerance vs the unfused f32 reference)
        (jnp.float32, 1e-3),    # tight check of the fusion algebra
        (jnp.bfloat16, 2e-2),   # production path: bf16 operands, f32 accumulation
    ]
    fused = {
        wdt: make_capsule_fused_params(w1, b1, w2, b2, ch_in=ch_in, n_in=n_in,
                                       ch_out=ch_out, n_out=n_out, weight_dtype=wdt)
        for wdt, _ in variants
    }

    # B=13 exercises ragged-batch padding; B=40 exercises the multi-tile (2-step) grid path
    for B in (8, 13, 40):
        x = jax.random.normal(jax.random.fold_in(kx, B), (B, ch_in * n_in), dtype=jnp.float32)
        ref = _reference(x, w1, b1, w2, b2, ch_in=ch_in, n_in=n_in, ch_out=ch_out, n_out=n_out)

        for wdt, tol in variants:
            w_fused, b_fused = fused[wdt]
            out = capsules_linear_forward(
                x, w_fused, b_fused, ch_in=ch_in, n_in=n_in, ch_out=ch_out, n_out=n_out
            )
            out = jax.block_until_ready(out)
            assert out.shape == (B, ch_out, n_out)
            assert jnp.allclose(out, ref, atol=tol, rtol=tol), \
                f"mismatch vs reference (B={B}, weight_dtype={wdt})"

    print("KERNEL_OK")
</pallas_src>

<mosaic_0001>
module attributes {stable_mosaic.version = 11 : i64} {
  func.func @_capsule_fused_kernel(%arg0: i32, %arg1: memref<8x32xf32, #tpu.memory_space<vmem>>, %arg2: memref<32x128xf32, #tpu.memory_space<vmem>>, %arg3: memref<1x128xf32, #tpu.memory_space<vmem>>, %arg4: memref<8x128xf32, #tpu.memory_space<vmem>>) attributes {dimension_semantics = [#tpu.dimension_semantics<parallel>], iteration_bounds = array<i64: 1>, scalar_prefetch = 0 : i64, scratch_operands = 0 : i64, tpu.core_type = #tpu.core_type<tc>, window_params = [{transform_indices = @transform_0, window_bounds = array<i64: 8, 32>}, {pipeline_mode = #tpu.pipeline_mode<synchronous>, transform_indices = @transform_1, window_bounds = array<i64: 32, 128>}, {pipeline_mode = #tpu.pipeline_mode<synchronous>, transform_indices = @transform_2, window_bounds = array<i64: 1, 128>}, {transform_indices = @transform_3, window_bounds = array<i64: 8, 128>}]} {
    %c0 = arith.constant 0 : index
    %c0_0 = arith.constant 0 : index
    %0 = vector.load %arg1[%c0, %c0_0] : memref<8x32xf32, #tpu.memory_space<vmem>>, vector<8x32xf32>
    %c0_1 = arith.constant 0 : index
    %c0_2 = arith.constant 0 : index
    %1 = vector.load %arg2[%c0_1, %c0_2] : memref<32x128xf32, #tpu.memory_space<vmem>>, vector<32x128xf32>
    %cst = arith.constant dense<0.000000e+00> : vector<8x128xf32>
    %2 = tpu.matmul %0, %1, %cst {dimension_numbers = #tpu.dot_dimension_numbers<[1], [0], [0], [1], [0, 0, 1, 1], [], []>} : vector<8x32xf32>, vector<32x128xf32>, vector<8x128xf32> -> vector<8x128xf32>
    %c0_3 = arith.constant 0 : index
    %c0_4 = arith.constant 0 : index
    %3 = vector.load %arg3[%c0_3, %c0_4] : memref<1x128xf32, #tpu.memory_space<vmem>>, vector<1x128xf32>
    %4 = vector.broadcast %3 : vector<1x128xf32> to vector<8x128xf32>
    %5 = arith.addf %2, %4 : vector<8x128xf32>
    %c0_5 = arith.constant 0 : index
    %c0_6 = arith.constant 0 : index
    %6 = vector.load %arg4[%c0_5, %c0_6] : memref<8x128xf32, #tpu.memory_space<vmem>>, vector<8x128xf32>
    tpu.vector_store %arg4[%c0_5, %c0_6], %5 {strides = array<i32>} : memref<8x128xf32, #tpu.memory_space<vmem>>, vector<8x128xf32>,
    return
  }
  func.func @transform_0(%arg0: i32) -> (i32, i32) {
    %c0_i32 = arith.constant 0 : i32
    %c0_i32_0 = arith.constant 0 : i32
    return %arg0, %c0_i32 : i32, i32
  }
  func.func @transform_1(%arg0: i32) -> (i32, i32) {
    %c0_i32 = arith.constant 0 : i32
    %c0_i32_0 = arith.constant 0 : i32
    %c0_i32_1 = arith.constant 0 : i32
    return %c0_i32, %c0_i32_0 : i32, i32
  }
  func.func @transform_2(%arg0: i32) -> (i32, i32) {
    %c0_i32 = arith.constant 0 : i32
    %c0_i32_0 = arith.constant 0 : i32
    %c0_i32_1 = arith.constant 0 : i32
    return %c0_i32, %c0_i32_0 : i32, i32
  }
  func.func @transform_3(%arg0: i32) -> (i32, i32) {
    %c0_i32 = arith.constant 0 : i32
    %c0_i32_0 = arith.constant 0 : i32
    return %arg0, %c0_i32 : i32, i32
  }
}

</mosaic_0001>

<llo_original>
// kernel: tpu_custom_call.1
$region0: #{tpu_custom_call.1}
  #allocation0 [shape = 'u32[]', space=smem, size = 0x4, offset = 0x4, fixed_abs, tag = 'smem constant byte address 0x4 - core index']
  #allocation1 [shape = 'u32[144,128]{1,0:T(1,128)}', space=vmem, size = 0x12000, scoped, tag = 'internal scratch']
  %s0 = inlined_call_operand.hbm [shape: f32[8,32], index: 0, kind: input, shape index: {}]
  %s1 = inlined_call_operand.hbm [shape: f32[32,128], index: 1, kind: input, shape index: {}]
  %s2 = inlined_call_operand.vmem [shape: f32[1,128], index: 2, kind: input, shape index: {}]
  %s3 = inlined_call_operand.hbm [shape: f32[8,128], index: 3, kind: output, shape index: {}]
  %s4 = sld [smem:[#allocation0]]
  $region30: #{tpu_custom_call.1} parent=0
    _
  %s6 = ssub.s32 1, %s4
  %s7 = scalar_select 0, %s6, %s4
  $region1: #{tpu_custom_call.1} parent=0
    #allocation2 [shape = 'u8[4096]{0}', space=vmem, size = 0x1000, scoped, tag = 'input window, operand 0, single buffered']
    #allocation3 [shape = 's32[1]{0}', space=sflag, size = 0x4, scoped, tag = 'scoped memory for tpu_custom_call.1']
    #allocation4 [shape = 's32[1]{0}', space=sflag, size = 0x4, scoped, tag = 'scoped memory for tpu_custom_call.1']
    #allocation5 [shape = 'u8[16384]{0}', space=vmem, size = 0x4000, scoped, tag = 'input window, operand 1, single buffered']
    #allocation6 [shape = 's32[1]{0}', space=sflag, size = 0x4, scoped, tag = 'scoped memory for tpu_custom_call.1']
    #allocation7 [shape = 'u8[4096]{0}', space=vmem, size = 0x1000, scoped, tag = 'output window, operand 0, single buffered']
    %8 = vsyncpa [#allocation3], 0
    %9 = vsyncpa [#allocation6], 0
    %10 = vsyncpa [#allocation4], 0
    // Predicated region
    $region2: #{tpu_custom_call.1} parent=1 // pred_check
      _
    $region3: #{tpu_custom_call.1} parent=1 // pred_check_branch
      %12 = sbr.rel (0) target = $region5
    $region4: #{tpu_custom_call.1} parent=1 // pred_region
      %s14 = ssub.s32 128, 128
      %15 = vsyncadd [#allocation3], %s14
      %s17 = sshll.u32 [#allocation2], 4
      %s18 = int_to_ptr.vmem [resolvable:$true] %s17
      %20 = dma.hbm_to_vmem [thread:$0]  %s0, 128, %s18, [#allocation3]
    $region5: #{tpu_custom_call.1} parent=1 // pred_fallthru
      _
    // Predicated region
    $region6: #{tpu_custom_call.1} parent=1 // pred_check
      _
    $region7: #{tpu_custom_call.1} parent=1 // pred_check_branch
      %22 = sbr.rel (0) target = $region9
    $region8: #{tpu_custom_call.1} parent=1 // pred_region
      %s24 = ssub.s32 512, 512
      %25 = vsyncadd [#allocation6], %s24
      %s26 = sshll.u32 [#allocation5], 4
      %s27 = int_to_ptr.vmem [resolvable:$true] %s26
      %32 = dma.hbm_to_vmem [thread:$0]  %s1, 512, %s27, [#allocation6], 128, 128, 8
    $region9: #{tpu_custom_call.1} parent=1 // pred_fallthru
      _
    // Predicated region
    $region10: #{tpu_custom_call.1} parent=1 // pred_check
      _
    $region11: #{tpu_custom_call.1} parent=1 // pred_check_branch
      %34 = sbr.rel (0) target = $region13
    $region12: #{tpu_custom_call.1} parent=1 // pred_region
      _
    $region13: #{tpu_custom_call.1} parent=1 // pred_fallthru
      _
    // Predicated region
    $region14: #{tpu_custom_call.1} parent=1 // pred_check
      _
    $region15: #{tpu_custom_call.1} parent=1 // pred_check_branch
      %36 = sbr.rel (0) target = $region17
    $region16: #{tpu_custom_call.1} parent=1 // pred_region
      %37 = dma.done [#allocation3], 128
    $region17: #{tpu_custom_call.1} parent=1 // pred_fallthru
      _
    // Predicated region
    $region18: #{tpu_custom_call.1} parent=1 // pred_check
      _
    $region19: #{tpu_custom_call.1} parent=1 // pred_check_branch
      %39 = sbr.rel (0) target = $region21
    $region20: #{tpu_custom_call.1} parent=1 // pred_region
      %40 = dma.done [#allocation6], 512
    $region21: #{tpu_custom_call.1} parent=1 // pred_fallthru
      _
    %v41 = vld [vmem:[#allocation2] sm:$0xff]
    %v42 = vld [vmem:[#allocation5] sm:$0xff]
    %v43 = vld [vmem:[#allocation5 + $0x8] sm:$0xff]
    %v44 = vld [vmem:[#allocation5 + $0x10] sm:$0xff]
    %v45 = vld [vmem:[#allocation5 + $0x18] sm:$0xff]
    %v46 = vld [vmem:[%s2] sm:$0x1]
    %v48 = vlaneseq
    %v49 = vshrl.u32 %v48, 7
    %v50 = vsub.s32 0, %v49
    %v51 = vrot.slane %v46, %v50
    %vm53 = vcmask 261120
    %v55 = vsel %vm53, %v41, 0
    %57 = vmatprep.subr.mxu0 0.0
    %58 = vmatpush1.msra.mxu0 %v42
    %59 = vmatprep.subr.mxu0 0.0
    %60 = vmatpush1.msra.mxu0 %v43
    %61 = vmatprep.subr.mxu0 0.0
    %62 = vmatpush1.msra.mxu0 %v44
    %63 = vmatprep.subr.mxu0 0.0
    %64 = vmatpush1.msra.mxu0 %v45
    %65 = vmatprep.subr.mxu0 0.0
    %66 = vmatpush1.msra.mxu0 0.0
    %67 = vmatprep.subr.mxu0 0.0
    %68 = vmatpush1.msra.mxu0 0.0
    %69 = vmatprep.subr.mxu0 0.0
    %70 = vmatpush1.msra.mxu0 0.0
    %71 = vmatprep.subr.mxu0 0.0
    %72 = vmatpush1.msra.mxu0 0.0
    %73 = vmatprep.subr.mxu0 0.0
    %74 = vmatpush1.msra.mxu0 0.0
    %75 = vmatprep.subr.mxu0 0.0
    %76 = vmatpush1.msra.mxu0 0.0
    %77 = vmatprep.subr.mxu0 0.0
    %78 = vmatpush1.msra.mxu0 0.0
    %79 = vmatprep.subr.mxu0 0.0
    %80 = vmatpush1.msra.mxu0 0.0
    %81 = vmatprep.subr.mxu0 0.0
    %82 = vmatpush1.msra.mxu0 0.0
    %83 = vmatprep.subr.mxu0 0.0
    %84 = vmatpush1.msra.mxu0 0.0
    %85 = vmatprep.subr.mxu0 0.0
    %86 = vmatpush1.msra.mxu0 0.0
    %87 = vmatprep.subr.mxu0 0.0
    %88 = vmatpush1.msra.mxu0 0.0
    %89 = vmatprep.subr.mxu0 0.0
    %90 = vmatpush1.msra.mxu0 0.0
    %91 = vmatprep.subr.mxu0 0.0
    %92 = vmatpush1.msra.mxu0 0.0
    %93 = vmatprep.subr.mxu0 0.0
    %94 = vmatpush1.msra.mxu0 0.0
    %95 = vmatprep.subr.mxu0 0.0
    %96 = vmatpush1.msra.mxu0 0.0
    %97 = vmatprep.subr.mxu0 0.0
    %98 = vmatpush1.msra.mxu0 0.0
    %99 = vmatprep.subr.mxu0 0.0
    %100 = vmatpush1.msra.mxu0 0.0
    %101 = vmatprep.subr.mxu0 0.0
    %102 = vmatpush1.msra.mxu0 0.0
    %103 = vmatprep.subr.mxu0 0.0
    %104 = vmatpush1.msra.mxu0 0.0
    %105 = vmatprep.subr.mxu0 0.0
    %106 = vmatpush1.msra.mxu0 0.0
    %107 = vmatprep.subr.mxu0 0.0
    %108 = vmatpush1.msra.mxu0 0.0
    %109 = vmatprep.subr.mxu0 0.0
    %110 = vmatpush1.msra.mxu0 0.0
    %111 = vmatprep.subr.mxu0 0.0
    %112 = vmatpush1.msra.mxu0 0.0
    %113 = vmatprep.subr.mxu0 0.0
    %114 = vmatpush1.msra.mxu0 0.0
    %115 = vmatprep.subr.mxu0 0.0
    %116 = vmatpush1.msra.mxu0 0.0
    %117 = vmatprep.subr.mxu0 0.0
    %118 = vmatpush1.msra.mxu0 0.0
    %119 = vmatprep.subr.mxu0 0.0
    %120 = vmatpush1.msra.mxu0 0.0
    %121 = vmatprep.mubr.f32.mxu0 0.0
    %122 = vmatmul.mubr.f32.gmra.mrb[0].mxu0 %v55
    %v123 = vpop.f32.mrb[0].mxu0
    %v124 = vadd.f32 %v51, %v123
    %v125 = vpop.f32.mrb[0].mxu0
    %126 = vdwg.mxu0
    %127 = vst [vmem:[#allocation7] sm:$0xff] %v124
    // Predicated region
    $region22: #{tpu_custom_call.1} parent=1 // pred_check
      _
    $region23: #{tpu_custom_call.1} parent=1 // pred_check_branch
      %129 = sbr.rel (0) target = $region25
    $region24: #{tpu_custom_call.1} parent=1 // pred_region
      %s131 = ssub.s32 128, 128
      %132 = vsyncadd [#allocation4], %s131
      %s134 = sshll.u32 [#allocation7], 4
      %s135 = int_to_ptr.vmem [resolvable:$true] %s134
      %137 = dma.vmem_to_hbm [thread:$0]  %s135, 128, %s3, [#allocation4]
    $region25: #{tpu_custom_call.1} parent=1 // pred_fallthru
      _
    // Predicated region
    $region26: #{tpu_custom_call.1} parent=1 // pred_check
      _
    $region27: #{tpu_custom_call.1} parent=1 // pred_check_branch
      %139 = sbr.rel (0) target = $region29
    $region28: #{tpu_custom_call.1} parent=1 // pred_region
      %140 = dma.done [#allocation4], 128
    $region29: #{tpu_custom_call.1} parent=1 // pred_fallthru
      _
    %141 = vsyncpa [#allocation3], 1
    %142 = vsyncpa [#allocation6], 1
    %143 = vsyncpa [#allocation4], 1

</llo_original>
